<compile_context>
chip_gen: v7x
topology: tpu7x:2x2x1
jax: 0.10.0
libtpu: 0.0.40
codegen_flags: <defaults>
</compile_context>

<pallas_src>
import heapq
import numpy as np
import jax
import jax.numpy as jnp
from jax import lax
from jax.experimental import pallas as pl
from jax.experimental.pallas import tpu as pltpu


def _make_kernel(lane_dense_out):
    def user_choice_kernel(e_rows_ref, e_t_ref, c_ref, out_ref):
        Et = e_rows_ref[...]        # [TM, Dp]  cosine-normalized query rows (bf16 or f32)
        EfT = e_t_ref[...]          # [Dp, N]   cosine-normalized all users, pre-transposed
        TM = Et.shape[0]
        N = EfT.shape[1]

        # One native-form MXU matmul -> cosine similarities of this row tile vs every user.
        S = lax.dot_general(Et, EfT, (((1,), (0,)), ((), ())),
                            preferred_element_type=jnp.float32)              # [TM, N] f32

        col_idx = lax.broadcasted_iota(jnp.int32, (1, N), 1)                  # broadcast iota
        neg_inf = jnp.float32(-jnp.inf)

        # Top-6 per row via masked row-max rounds (tie-break: smallest column index, matching
        # heapq.nlargest). Only the selection mask is accumulated; one masked sum at the end.
        Sm = S
        selected = None
        for _ in range(min(6, N)):                                            # static unroll
            row_max = jnp.max(Sm, axis=-1, keepdims=True)                     # [TM, 1]
            is_max = Sm == row_max
            first_idx = jnp.min(jnp.where(is_max, col_idx, N),
                                axis=-1, keepdims=True)                       # [TM, 1]
            is_first = col_idx == first_idx                                   # [TM, N] one-hot
            selected = is_first if selected is None else (selected | is_first)
            Sm = jnp.where(is_first, neg_inf, Sm)

        keep = selected & (c_ref[...] != 0)                                   # int8 indicator
        p = jnp.sum(jnp.where(keep, S, 0.0), axis=-1, keepdims=True) * jnp.float32(1.0 / 6.0)

        if lane_dense_out:
            out_ref[...] = jnp.transpose(p)                                   # (1, TM) dense
        else:
            out_ref[...] = p                                                  # (TM, 1) fallback
    return user_choice_kernel


def _vmem_limit_bytes():
    try:
        cap = int(pltpu.get_tpu_info().vmem_capacity_bytes)
    except Exception:
        cap = 64 * 1024 * 1024            # conservative default (v7x per-TC physical VMEM)
    return int(0.85 * cap)                # always leave compiler/internal-scratch headroom


def _choose_row_tile(N, Dp, ebytes, vmem_limit):
    # Small problems: one tile covers everything (block == full padded array dims).
    if N <= 256:
        return ((N + 7) // 8) * 8
    big_vmem = vmem_limit > 80 * 1024 * 1024           # 128 MiB parts (v5e / v6e)
    budget = int((0.70 if big_vmem else 0.50) * vmem_limit)
    resident = 2 * N * Dp * ebytes                     # resident RHS, charged double-buffered
    # TODO(synk): no column tiling of the RHS yet -- if `resident` alone exceeds the budget
    # (very large N*Dp) the kernel will not fit even at the smallest row tile.

    def usage(t):
        return (resident
                + 2 * t * Dp * ebytes                  # double-buffered E row tile
                + 2 * t * N * 1                        # double-buffered int8 choice tile
                + 5 * t * N * 4)                       # live f32/bool [t, N] temporaries

    tm = 1024 if big_vmem else 512
    while tm > 64 and usage(tm) > budget:
        tm //= 2
    return tm


def user_choice_degree(users_embeddings, choice_matrix, *, use_bf16=True):
    E = jnp.asarray(users_embeddings, jnp.float32)
    C = jnp.asarray(choice_matrix)
    if C.dtype != jnp.int8:
        C = (C != 0).astype(jnp.int8)

    N, D = E.shape
    Dp = ((D + 127) // 128) * 128                      # lane-align the contraction dim
    if Dp != D:
        E = jnp.pad(E, ((0, 0), (0, Dp - D)))

    # Pre-normalize once (f32) so the kernel never touches norms; the matmul IS the cosine.
    En = E * lax.rsqrt(jnp.sum(E * E, axis=-1, keepdims=True) + 1e-12)
    ebytes = 2 if use_bf16 else 4
    En = En.astype(jnp.bfloat16 if use_bf16 else jnp.float32)
    E_T = En.T                                         # [Dp, N] resident RHS, pre-transposed

    vmem_limit = _vmem_limit_bytes()
    TM = _choose_row_tile(N, Dp, ebytes, vmem_limit)
    Npad = ((N + TM - 1) // TM) * TM
    num_tiles = Npad // TM
    E_rows = En if Npad == N else jnp.pad(En, ((0, Npad - N), (0, 0)))
    C_rows = C if Npad == N else jnp.pad(C, ((0, Npad - N), (0, 0)))

    cost = pl.CostEstimate(
        flops=int(2 * Npad * N * Dp + 40 * Npad * N),
        transcendentals=0,
        bytes_accessed=int(Npad * Dp * ebytes + N * Dp * ebytes + Npad * N + Npad * 4),
    )
    cparams = pltpu.CompilerParams(
        dimension_semantics=("parallel",),
        vmem_limit_bytes=vmem_limit,
    )

    def run(optimized):
        if optimized:
            # Single-buffer the constant-index resident RHS; lane-dense (1, TM) output blocks.
            rhs_spec = pl.BlockSpec((Dp, N), lambda i: (0, 0), pipeline_mode=pl.Buffered(1))
            out_shape = jax.ShapeDtypeStruct((num_tiles, TM), jnp.float32)
            out_spec = pl.BlockSpec((1, TM), lambda i: (i, 0))
        else:
            rhs_spec = pl.BlockSpec((Dp, N), lambda i: (0, 0))
            out_shape = jax.ShapeDtypeStruct((Npad, 1), jnp.float32)
            out_spec = pl.BlockSpec((TM, 1), lambda i: (i, 0))
        return pl.pallas_call(
            _make_kernel(lane_dense_out=optimized),
            out_shape=out_shape,
            grid=(num_tiles,),
            in_specs=[
                pl.BlockSpec((TM, Dp), lambda i: (i, 0)),   # query-user row tile (pipelined)
                rhs_spec,                                   # full user set, resident
                pl.BlockSpec((TM, N), lambda i: (i, 0)),    # int8 choice-indicator tile
            ],
            out_specs=out_spec,
            compiler_params=cparams,
            cost_estimate=cost,
        )(E_rows, E_T, C_rows)

    try:
        out = run(True).reshape(-1)[:N]
    except Exception:
        # Fallback for JAX versions without BlockSpec(pipeline_mode=...) or the degenerate
        # (TM,1)->(1,TM) transpose: conservative double-buffered RHS + column output layout.
        out = run(False)[:N, 0]
    return out


if __name__ == "__main__":
    key = jax.random.PRNGKey(0)
    N, D = 8, 32
    k1, k2, k3 = jax.random.split(key, 3)

    # deterministic "users_embeddings" (set via User_choice.fun in the reference)
    users_embeddings = jax.random.normal(k1, (N, D), dtype=jnp.float32)

    # deterministic synthetic ids / course-history dict (the module's `course` arg)
    n_users = list(range(N))
    n_entitys = [int(c) for c in np.asarray(jax.random.randint(k2, (N,), 0, 10))]
    hist = np.asarray(jax.random.randint(k3, (N, 4), 0, 10))
    course = {u: [int(c) for c in hist[u]] for u in range(N)}

    # TODO(synk): the Python dict membership lookup has no Pallas equivalent; it is
    # materialized host-side as a dense int8 indicator matrix consumed by the kernel.
    C_np = np.zeros((N, N), dtype=np.int8)
    for l, crs in enumerate(n_entitys):
        for j, u in enumerate(n_users):
            C_np[l, j] = 1 if int(crs) in course.get(int(u), []) else 0
    C = jnp.asarray(C_np)

    def ref_degrees_from_sims(S_np):
        # mirrors the module's heapq/numpy logic given a precomputed similarity matrix
        ref = []
        for l in range(N):
            sims = [float(S_np[l, j]) for j in range(N)]
            top = heapq.nlargest(6, range(N), sims.__getitem__)
            p = 0.0
            for idx in top:
                i = 1 if int(n_entitys[l]) in course.get(int(n_users[idx]), []) else 0
                p += sims[idx] * i
            ref.append(p / 6.0)
        return np.asarray(ref, dtype=np.float32)

    # f32 path: checked against the module-faithful float64 cosine reference.
    out_f32 = jax.block_until_ready(user_choice_degree(users_embeddings, C, use_bf16=False))
    E64 = np.asarray(users_embeddings, np.float64)
    En64 = E64 / np.linalg.norm(E64, axis=-1, keepdims=True)
    assert np.allclose(np.asarray(out_f32), ref_degrees_from_sims(En64 @ En64.T), atol=1e-4)

    # bf16 fast path (default): checked against the same math on the bf16-rounded normalized
    # embeddings (bf16 MXU products are exact; f32-vs-f64 accumulation differs by ~1e-7).
    out_bf16 = jax.block_until_ready(user_choice_degree(users_embeddings, C, use_bf16=True))
    Ef32 = jnp.asarray(users_embeddings, jnp.float32)
    En_f32 = Ef32 * lax.rsqrt(jnp.sum(Ef32 * Ef32, axis=-1, keepdims=True) + 1e-12)
    En_bf = np.asarray(En_f32.astype(jnp.bfloat16).astype(jnp.float32), np.float64)
    assert np.allclose(np.asarray(out_bf16), ref_degrees_from_sims(En_bf @ En_bf.T), atol=1e-4)

    print("KERNEL_OK")
</pallas_src>

<mosaic_0001>
module attributes {stable_mosaic.version = 11 : i64} {
  func.func @user_choice_kernel(%arg0: i32, %arg1: memref<8x128xf32, #tpu.memory_space<vmem>>, %arg2: memref<128x8xf32, #tpu.memory_space<vmem>>, %arg3: memref<8x8xi8, #tpu.memory_space<vmem>>, %arg4: memref<1x8xf32, #tpu.memory_space<vmem>>) attributes {dimension_semantics = [#tpu.dimension_semantics<parallel>], iteration_bounds = array<i64: 1>, scalar_prefetch = 0 : i64, scratch_operands = 0 : i64, tpu.core_type = #tpu.core_type<tc>, window_params = [{transform_indices = @transform_0, window_bounds = array<i64: 8, 128>}, {pipeline_mode = #tpu.pipeline_mode<synchronous>, transform_indices = @transform_1, window_bounds = array<i64: 128, 8>}, {transform_indices = @transform_2, window_bounds = array<i64: 8, 8>}, {transform_indices = @transform_3, window_bounds = array<i64: 1, 8>}]} {
    %c0 = arith.constant 0 : index
    %c0_0 = arith.constant 0 : index
    %0 = vector.load %arg1[%c0, %c0_0] : memref<8x128xf32, #tpu.memory_space<vmem>>, vector<8x128xf32>
    %c0_1 = arith.constant 0 : index
    %c0_2 = arith.constant 0 : index
    %1 = vector.load %arg2[%c0_1, %c0_2] : memref<128x8xf32, #tpu.memory_space<vmem>>, vector<128x8xf32>
    %cst = arith.constant dense<0.000000e+00> : vector<8x8xf32>
    %2 = tpu.matmul %0, %1, %cst {dimension_numbers = #tpu.dot_dimension_numbers<[1], [0], [0], [1], [0, 0, 1, 1], [], []>} : vector<8x128xf32>, vector<128x8xf32>, vector<8x8xf32> -> vector<8x8xf32>
    %3 = tpu.iota {dimensions = array<i32: 1>} : vector<1x8xi32>
    %cst_3 = arith.constant dense<0xFF800000> : vector<8xf32>
    %4 = vector.multi_reduction <maximumf>, %2, %cst_3 [1] : vector<8x8xf32> to vector<8xf32>
    %5 = vector.shape_cast %4 : vector<8xf32> to vector<8x1xf32>
    %6 = vector.broadcast %5 : vector<8x1xf32> to vector<8x8xf32>
    %7 = arith.cmpf oeq, %2, %6 : vector<8x8xf32>
    %c8_i32 = arith.constant 8 : i32
    %8 = vector.shape_cast %3 : vector<1x8xi32> to vector<1x8xi32>
    %9 = vector.broadcast %8 : vector<1x8xi32> to vector<8x8xi32>
    %10 = vector.broadcast %c8_i32 : i32 to vector<8x8xi32>
    %11 = arith.select %7, %9, %10 : vector<8x8xi1>, vector<8x8xi32>
    %cst_4 = arith.constant dense<2147483647> : vector<8xi32>
    %12 = vector.multi_reduction <minsi>, %11, %cst_4 [1] : vector<8x8xi32> to vector<8xi32>
    %13 = vector.shape_cast %12 : vector<8xi32> to vector<8x1xi32>
    %14 = vector.broadcast %3 : vector<1x8xi32> to vector<8x8xi32>
    %15 = vector.broadcast %13 : vector<8x1xi32> to vector<8x8xi32>
    %16 = arith.cmpi eq, %14, %15 : vector<8x8xi32>
    %cst_5 = arith.constant 0xFF800000 : f32
    %17 = vector.broadcast %cst_5 : f32 to vector<8x8xf32>
    %18 = arith.select %16, %17, %2 : vector<8x8xi1>, vector<8x8xf32>
    %cst_6 = arith.constant dense<0xFF800000> : vector<8xf32>
    %19 = vector.multi_reduction <maximumf>, %18, %cst_6 [1] : vector<8x8xf32> to vector<8xf32>
    %20 = vector.shape_cast %19 : vector<8xf32> to vector<8x1xf32>
    %21 = vector.broadcast %20 : vector<8x1xf32> to vector<8x8xf32>
    %22 = arith.cmpf oeq, %18, %21 : vector<8x8xf32>
    %c8_i32_7 = arith.constant 8 : i32
    %23 = vector.shape_cast %3 : vector<1x8xi32> to vector<1x8xi32>
    %24 = vector.broadcast %23 : vector<1x8xi32> to vector<8x8xi32>
    %25 = vector.broadcast %c8_i32_7 : i32 to vector<8x8xi32>
    %26 = arith.select %22, %24, %25 : vector<8x8xi1>, vector<8x8xi32>
    %cst_8 = arith.constant dense<2147483647> : vector<8xi32>
    %27 = vector.multi_reduction <minsi>, %26, %cst_8 [1] : vector<8x8xi32> to vector<8xi32>
    %28 = vector.shape_cast %27 : vector<8xi32> to vector<8x1xi32>
    %29 = vector.broadcast %3 : vector<1x8xi32> to vector<8x8xi32>
    %30 = vector.broadcast %28 : vector<8x1xi32> to vector<8x8xi32>
    %31 = arith.cmpi eq, %29, %30 : vector<8x8xi32>
    %32 = arith.ori %16, %31 : vector<8x8xi1>
    %cst_9 = arith.constant 0xFF800000 : f32
    %33 = vector.broadcast %cst_9 : f32 to vector<8x8xf32>
    %34 = arith.select %31, %33, %18 : vector<8x8xi1>, vector<8x8xf32>
    %cst_10 = arith.constant dense<0xFF800000> : vector<8xf32>
    %35 = vector.multi_reduction <maximumf>, %34, %cst_10 [1] : vector<8x8xf32> to vector<8xf32>
    %36 = vector.shape_cast %35 : vector<8xf32> to vector<8x1xf32>
    %37 = vector.broadcast %36 : vector<8x1xf32> to vector<8x8xf32>
    %38 = arith.cmpf oeq, %34, %37 : vector<8x8xf32>
    %c8_i32_11 = arith.constant 8 : i32
    %39 = vector.shape_cast %3 : vector<1x8xi32> to vector<1x8xi32>
    %40 = vector.broadcast %39 : vector<1x8xi32> to vector<8x8xi32>
    %41 = vector.broadcast %c8_i32_11 : i32 to vector<8x8xi32>
    %42 = arith.select %38, %40, %41 : vector<8x8xi1>, vector<8x8xi32>
    %cst_12 = arith.constant dense<2147483647> : vector<8xi32>
    %43 = vector.multi_reduction <minsi>, %42, %cst_12 [1] : vector<8x8xi32> to vector<8xi32>
    %44 = vector.shape_cast %43 : vector<8xi32> to vector<8x1xi32>
    %45 = vector.broadcast %3 : vector<1x8xi32> to vector<8x8xi32>
    %46 = vector.broadcast %44 : vector<8x1xi32> to vector<8x8xi32>
    %47 = arith.cmpi eq, %45, %46 : vector<8x8xi32>
    %48 = arith.ori %32, %47 : vector<8x8xi1>
    %cst_13 = arith.constant 0xFF800000 : f32
    %49 = vector.broadcast %cst_13 : f32 to vector<8x8xf32>
    %50 = arith.select %47, %49, %34 : vector<8x8xi1>, vector<8x8xf32>
    %cst_14 = arith.constant dense<0xFF800000> : vector<8xf32>
    %51 = vector.multi_reduction <maximumf>, %50, %cst_14 [1] : vector<8x8xf32> to vector<8xf32>
    %52 = vector.shape_cast %51 : vector<8xf32> to vector<8x1xf32>
    %53 = vector.broadcast %52 : vector<8x1xf32> to vector<8x8xf32>
    %54 = arith.cmpf oeq, %50, %53 : vector<8x8xf32>
    %c8_i32_15 = arith.constant 8 : i32
    %55 = vector.shape_cast %3 : vector<1x8xi32> to vector<1x8xi32>
    %56 = vector.broadcast %55 : vector<1x8xi32> to vector<8x8xi32>
    %57 = vector.broadcast %c8_i32_15 : i32 to vector<8x8xi32>
    %58 = arith.select %54, %56, %57 : vector<8x8xi1>, vector<8x8xi32>
    %cst_16 = arith.constant dense<2147483647> : vector<8xi32>
    %59 = vector.multi_reduction <minsi>, %58, %cst_16 [1] : vector<8x8xi32> to vector<8xi32>
    %60 = vector.shape_cast %59 : vector<8xi32> to vector<8x1xi32>
    %61 = vector.broadcast %3 : vector<1x8xi32> to vector<8x8xi32>
    %62 = vector.broadcast %60 : vector<8x1xi32> to vector<8x8xi32>
    %63 = arith.cmpi eq, %61, %62 : vector<8x8xi32>
    %64 = arith.ori %48, %63 : vector<8x8xi1>
    %cst_17 = arith.constant 0xFF800000 : f32
    %65 = vector.broadcast %cst_17 : f32 to vector<8x8xf32>
    %66 = arith.select %63, %65, %50 : vector<8x8xi1>, vector<8x8xf32>
    %cst_18 = arith.constant dense<0xFF800000> : vector<8xf32>
    %67 = vector.multi_reduction <maximumf>, %66, %cst_18 [1] : vector<8x8xf32> to vector<8xf32>
    %68 = vector.shape_cast %67 : vector<8xf32> to vector<8x1xf32>
    %69 = vector.broadcast %68 : vector<8x1xf32> to vector<8x8xf32>
    %70 = arith.cmpf oeq, %66, %69 : vector<8x8xf32>
    %c8_i32_19 = arith.constant 8 : i32
    %71 = vector.shape_cast %3 : vector<1x8xi32> to vector<1x8xi32>
    %72 = vector.broadcast %71 : vector<1x8xi32> to vector<8x8xi32>
    %73 = vector.broadcast %c8_i32_19 : i32 to vector<8x8xi32>
    %74 = arith.select %70, %72, %73 : vector<8x8xi1>, vector<8x8xi32>
    %cst_20 = arith.constant dense<2147483647> : vector<8xi32>
    %75 = vector.multi_reduction <minsi>, %74, %cst_20 [1] : vector<8x8xi32> to vector<8xi32>
    %76 = vector.shape_cast %75 : vector<8xi32> to vector<8x1xi32>
    %77 = vector.broadcast %3 : vector<1x8xi32> to vector<8x8xi32>
    %78 = vector.broadcast %76 : vector<8x1xi32> to vector<8x8xi32>
    %79 = arith.cmpi eq, %77, %78 : vector<8x8xi32>
    %80 = arith.ori %64, %79 : vector<8x8xi1>
    %cst_21 = arith.constant 0xFF800000 : f32
    %81 = vector.broadcast %cst_21 : f32 to vector<8x8xf32>
    %82 = arith.select %79, %81, %66 : vector<8x8xi1>, vector<8x8xf32>
    %cst_22 = arith.constant dense<0xFF800000> : vector<8xf32>
    %83 = vector.multi_reduction <maximumf>, %82, %cst_22 [1] : vector<8x8xf32> to vector<8xf32>
    %84 = vector.shape_cast %83 : vector<8xf32> to vector<8x1xf32>
    %85 = vector.broadcast %84 : vector<8x1xf32> to vector<8x8xf32>
    %86 = arith.cmpf oeq, %82, %85 : vector<8x8xf32>
    %c8_i32_23 = arith.constant 8 : i32
    %87 = vector.shape_cast %3 : vector<1x8xi32> to vector<1x8xi32>
    %88 = vector.broadcast %87 : vector<1x8xi32> to vector<8x8xi32>
    %89 = vector.broadcast %c8_i32_23 : i32 to vector<8x8xi32>
    %90 = arith.select %86, %88, %89 : vector<8x8xi1>, vector<8x8xi32>
    %cst_24 = arith.constant dense<2147483647> : vector<8xi32>
    %91 = vector.multi_reduction <minsi>, %90, %cst_24 [1] : vector<8x8xi32> to vector<8xi32>
    %92 = vector.shape_cast %91 : vector<8xi32> to vector<8x1xi32>
    %93 = vector.broadcast %3 : vector<1x8xi32> to vector<8x8xi32>
    %94 = vector.broadcast %92 : vector<8x1xi32> to vector<8x8xi32>
    %95 = arith.cmpi eq, %93, %94 : vector<8x8xi32>
    %96 = arith.ori %80, %95 : vector<8x8xi1>
    %c0_25 = arith.constant 0 : index
    %c0_26 = arith.constant 0 : index
    %97 = vector.load %arg3[%c0_25, %c0_26] : memref<8x8xi8, #tpu.memory_space<vmem>>, vector<8x8xi8>
    %c0_i8 = arith.constant 0 : i8
    %98 = vector.broadcast %c0_i8 : i8 to vector<8x8xi8>
    %99 = arith.cmpi ne, %97, %98 : vector<8x8xi8>
    %100 = arith.andi %96, %99 : vector<8x8xi1>
    %cst_27 = arith.constant 0.000000e+00 : f32
    %101 = vector.broadcast %cst_27 : f32 to vector<8x8xf32>
    %102 = arith.select %100, %2, %101 : vector<8x8xi1>, vector<8x8xf32>
    %cst_28 = arith.constant dense<0.000000e+00> : vector<8xf32>
    %103 = vector.multi_reduction <add>, %102, %cst_28 [1] : vector<8x8xf32> to vector<8xf32>
    %104 = vector.shape_cast %103 : vector<8xf32> to vector<8x1xf32>
    %cst_29 = arith.constant 0.166666672 : f32
    %105 = vector.broadcast %cst_29 : f32 to vector<8x1xf32>
    %106 = arith.mulf %104, %105 : vector<8x1xf32>
    %107 = tpu.transpose %106, [1, 0] : vector<8x1xf32> -> vector<1x8xf32>
    %c0_30 = arith.constant 0 : index
    %c0_31 = arith.constant 0 : index
    %108 = vector.load %arg4[%c0_30, %c0_31] : memref<1x8xf32, #tpu.memory_space<vmem>>, vector<1x8xf32>
    tpu.vector_store %arg4[%c0_30, %c0_31], %107 {strides = array<i32>} : memref<1x8xf32, #tpu.memory_space<vmem>>, vector<1x8xf32>,
    return
  }
  func.func @transform_0(%arg0: i32) -> (i32, i32) {
    %c0_i32 = arith.constant 0 : i32
    %c0_i32_0 = arith.constant 0 : i32
    return %arg0, %c0_i32 : i32, i32
  }
  func.func @transform_1(%arg0: i32) -> (i32, i32) {
    %c0_i32 = arith.constant 0 : i32
    %c0_i32_0 = arith.constant 0 : i32
    %c0_i32_1 = arith.constant 0 : i32
    return %c0_i32, %c0_i32_0 : i32, i32
  }
  func.func @transform_2(%arg0: i32) -> (i32, i32) {
    %c0_i32 = arith.constant 0 : i32
    %c0_i32_0 = arith.constant 0 : i32
    return %arg0, %c0_i32 : i32, i32
  }
  func.func @transform_3(%arg0: i32) -> (i32, i32) {
    %c0_i32 = arith.constant 0 : i32
    %c0_i32_0 = arith.constant 0 : i32
    return %arg0, %c0_i32 : i32, i32
  }
}

module attributes {stable_mosaic.version = 11 : i64} {
  func.func @user_choice_kernel(%arg0: i32, %arg1: memref<8x128xf32, #tpu.memory_space<vmem>>, %arg2: memref<128x8xf32, #tpu.memory_space<vmem>>, %arg3: memref<8x8xi8, #tpu.memory_space<vmem>>, %arg4: memref<8x1xf32, #tpu.memory_space<vmem>>) attributes {dimension_semantics = [#tpu.dimension_semantics<parallel>], iteration_bounds = array<i64: 1>, scalar_prefetch = 0 : i64, scratch_operands = 0 : i64, tpu.core_type = #tpu.core_type<tc>, window_params = [{transform_indices = @transform_0, window_bounds = array<i64: 8, 128>}, {pipeline_mode = #tpu.pipeline_mode<synchronous>, transform_indices = @transform_1, window_bounds = array<i64: 128, 8>}, {transform_indices = @transform_2, window_bounds = array<i64: 8, 8>}, {transform_indices = @transform_3, window_bounds = array<i64: 8, 1>}]} {
    %c0 = arith.constant 0 : index
    %c0_0 = arith.constant 0 : index
    %0 = vector.load %arg1[%c0, %c0_0] : memref<8x128xf32, #tpu.memory_space<vmem>>, vector<8x128xf32>
    %c0_1 = arith.constant 0 : index
    %c0_2 = arith.constant 0 : index
    %1 = vector.load %arg2[%c0_1, %c0_2] : memref<128x8xf32, #tpu.memory_space<vmem>>, vector<128x8xf32>
    %cst = arith.constant dense<0.000000e+00> : vector<8x8xf32>
    %2 = tpu.matmul %0, %1, %cst {dimension_numbers = #tpu.dot_dimension_numbers<[1], [0], [0], [1], [0, 0, 1, 1], [], []>} : vector<8x128xf32>, vector<128x8xf32>, vector<8x8xf32> -> vector<8x8xf32>
    %3 = tpu.iota {dimensions = array<i32: 1>} : vector<1x8xi32>
    %cst_3 = arith.constant dense<0xFF800000> : vector<8xf32>
    %4 = vector.multi_reduction <maximumf>, %2, %cst_3 [1] : vector<8x8xf32> to vector<8xf32>
    %5 = vector.shape_cast %4 : vector<8xf32> to vector<8x1xf32>
    %6 = vector.broadcast %5 : vector<8x1xf32> to vector<8x8xf32>
    %7 = arith.cmpf oeq, %2, %6 : vector<8x8xf32>
    %c8_i32 = arith.constant 8 : i32
    %8 = vector.shape_cast %3 : vector<1x8xi32> to vector<1x8xi32>
    %9 = vector.broadcast %8 : vector<1x8xi32> to vector<8x8xi32>
    %10 = vector.broadcast %c8_i32 : i32 to vector<8x8xi32>
    %11 = arith.select %7, %9, %10 : vector<8x8xi1>, vector<8x8xi32>
    %cst_4 = arith.constant dense<2147483647> : vector<8xi32>
    %12 = vector.multi_reduction <minsi>, %11, %cst_4 [1] : vector<8x8xi32> to vector<8xi32>
    %13 = vector.shape_cast %12 : vector<8xi32> to vector<8x1xi32>
    %14 = vector.broadcast %3 : vector<1x8xi32> to vector<8x8xi32>
    %15 = vector.broadcast %13 : vector<8x1xi32> to vector<8x8xi32>
    %16 = arith.cmpi eq, %14, %15 : vector<8x8xi32>
    %cst_5 = arith.constant 0xFF800000 : f32
    %17 = vector.broadcast %cst_5 : f32 to vector<8x8xf32>
    %18 = arith.select %16, %17, %2 : vector<8x8xi1>, vector<8x8xf32>
    %cst_6 = arith.constant dense<0xFF800000> : vector<8xf32>
    %19 = vector.multi_reduction <maximumf>, %18, %cst_6 [1] : vector<8x8xf32> to vector<8xf32>
    %20 = vector.shape_cast %19 : vector<8xf32> to vector<8x1xf32>
    %21 = vector.broadcast %20 : vector<8x1xf32> to vector<8x8xf32>
    %22 = arith.cmpf oeq, %18, %21 : vector<8x8xf32>
    %c8_i32_7 = arith.constant 8 : i32
    %23 = vector.shape_cast %3 : vector<1x8xi32> to vector<1x8xi32>
    %24 = vector.broadcast %23 : vector<1x8xi32> to vector<8x8xi32>
    %25 = vector.broadcast %c8_i32_7 : i32 to vector<8x8xi32>
    %26 = arith.select %22, %24, %25 : vector<8x8xi1>, vector<8x8xi32>
    %cst_8 = arith.constant dense<2147483647> : vector<8xi32>
    %27 = vector.multi_reduction <minsi>, %26, %cst_8 [1] : vector<8x8xi32> to vector<8xi32>
    %28 = vector.shape_cast %27 : vector<8xi32> to vector<8x1xi32>
    %29 = vector.broadcast %3 : vector<1x8xi32> to vector<8x8xi32>
    %30 = vector.broadcast %28 : vector<8x1xi32> to vector<8x8xi32>
    %31 = arith.cmpi eq, %29, %30 : vector<8x8xi32>
    %32 = arith.ori %16, %31 : vector<8x8xi1>
    %cst_9 = arith.constant 0xFF800000 : f32
    %33 = vector.broadcast %cst_9 : f32 to vector<8x8xf32>
    %34 = arith.select %31, %33, %18 : vector<8x8xi1>, vector<8x8xf32>
    %cst_10 = arith.constant dense<0xFF800000> : vector<8xf32>
    %35 = vector.multi_reduction <maximumf>, %34, %cst_10 [1] : vector<8x8xf32> to vector<8xf32>
    %36 = vector.shape_cast %35 : vector<8xf32> to vector<8x1xf32>
    %37 = vector.broadcast %36 : vector<8x1xf32> to vector<8x8xf32>
    %38 = arith.cmpf oeq, %34, %37 : vector<8x8xf32>
    %c8_i32_11 = arith.constant 8 : i32
    %39 = vector.shape_cast %3 : vector<1x8xi32> to vector<1x8xi32>
    %40 = vector.broadcast %39 : vector<1x8xi32> to vector<8x8xi32>
    %41 = vector.broadcast %c8_i32_11 : i32 to vector<8x8xi32>
    %42 = arith.select %38, %40, %41 : vector<8x8xi1>, vector<8x8xi32>
    %cst_12 = arith.constant dense<2147483647> : vector<8xi32>
    %43 = vector.multi_reduction <minsi>, %42, %cst_12 [1] : vector<8x8xi32> to vector<8xi32>
    %44 = vector.shape_cast %43 : vector<8xi32> to vector<8x1xi32>
    %45 = vector.broadcast %3 : vector<1x8xi32> to vector<8x8xi32>
    %46 = vector.broadcast %44 : vector<8x1xi32> to vector<8x8xi32>
    %47 = arith.cmpi eq, %45, %46 : vector<8x8xi32>
    %48 = arith.ori %32, %47 : vector<8x8xi1>
    %cst_13 = arith.constant 0xFF800000 : f32
    %49 = vector.broadcast %cst_13 : f32 to vector<8x8xf32>
    %50 = arith.select %47, %49, %34 : vector<8x8xi1>, vector<8x8xf32>
    %cst_14 = arith.constant dense<0xFF800000> : vector<8xf32>
    %51 = vector.multi_reduction <maximumf>, %50, %cst_14 [1] : vector<8x8xf32> to vector<8xf32>
    %52 = vector.shape_cast %51 : vector<8xf32> to vector<8x1xf32>
    %53 = vector.broadcast %52 : vector<8x1xf32> to vector<8x8xf32>
    %54 = arith.cmpf oeq, %50, %53 : vector<8x8xf32>
    %c8_i32_15 = arith.constant 8 : i32
    %55 = vector.shape_cast %3 : vector<1x8xi32> to vector<1x8xi32>
    %56 = vector.broadcast %55 : vector<1x8xi32> to vector<8x8xi32>
    %57 = vector.broadcast %c8_i32_15 : i32 to vector<8x8xi32>
    %58 = arith.select %54, %56, %57 : vector<8x8xi1>, vector<8x8xi32>
    %cst_16 = arith.constant dense<2147483647> : vector<8xi32>
    %59 = vector.multi_reduction <minsi>, %58, %cst_16 [1] : vector<8x8xi32> to vector<8xi32>
    %60 = vector.shape_cast %59 : vector<8xi32> to vector<8x1xi32>
    %61 = vector.broadcast %3 : vector<1x8xi32> to vector<8x8xi32>
    %62 = vector.broadcast %60 : vector<8x1xi32> to vector<8x8xi32>
    %63 = arith.cmpi eq, %61, %62 : vector<8x8xi32>
    %64 = arith.ori %48, %63 : vector<8x8xi1>
    %cst_17 = arith.constant 0xFF800000 : f32
    %65 = vector.broadcast %cst_17 : f32 to vector<8x8xf32>
    %66 = arith.select %63, %65, %50 : vector<8x8xi1>, vector<8x8xf32>
    %cst_18 = arith.constant dense<0xFF800000> : vector<8xf32>
    %67 = vector.multi_reduction <maximumf>, %66, %cst_18 [1] : vector<8x8xf32> to vector<8xf32>
    %68 = vector.shape_cast %67 : vector<8xf32> to vector<8x1xf32>
    %69 = vector.broadcast %68 : vector<8x1xf32> to vector<8x8xf32>
    %70 = arith.cmpf oeq, %66, %69 : vector<8x8xf32>
    %c8_i32_19 = arith.constant 8 : i32
    %71 = vector.shape_cast %3 : vector<1x8xi32> to vector<1x8xi32>
    %72 = vector.broadcast %71 : vector<1x8xi32> to vector<8x8xi32>
    %73 = vector.broadcast %c8_i32_19 : i32 to vector<8x8xi32>
    %74 = arith.select %70, %72, %73 : vector<8x8xi1>, vector<8x8xi32>
    %cst_20 = arith.constant dense<2147483647> : vector<8xi32>
    %75 = vector.multi_reduction <minsi>, %74, %cst_20 [1] : vector<8x8xi32> to vector<8xi32>
    %76 = vector.shape_cast %75 : vector<8xi32> to vector<8x1xi32>
    %77 = vector.broadcast %3 : vector<1x8xi32> to vector<8x8xi32>
    %78 = vector.broadcast %76 : vector<8x1xi32> to vector<8x8xi32>
    %79 = arith.cmpi eq, %77, %78 : vector<8x8xi32>
    %80 = arith.ori %64, %79 : vector<8x8xi1>
    %cst_21 = arith.constant 0xFF800000 : f32
    %81 = vector.broadcast %cst_21 : f32 to vector<8x8xf32>
    %82 = arith.select %79, %81, %66 : vector<8x8xi1>, vector<8x8xf32>
    %cst_22 = arith.constant dense<0xFF800000> : vector<8xf32>
    %83 = vector.multi_reduction <maximumf>, %82, %cst_22 [1] : vector<8x8xf32> to vector<8xf32>
    %84 = vector.shape_cast %83 : vector<8xf32> to vector<8x1xf32>
    %85 = vector.broadcast %84 : vector<8x1xf32> to vector<8x8xf32>
    %86 = arith.cmpf oeq, %82, %85 : vector<8x8xf32>
    %c8_i32_23 = arith.constant 8 : i32
    %87 = vector.shape_cast %3 : vector<1x8xi32> to vector<1x8xi32>
    %88 = vector.broadcast %87 : vector<1x8xi32> to vector<8x8xi32>
    %89 = vector.broadcast %c8_i32_23 : i32 to vector<8x8xi32>
    %90 = arith.select %86, %88, %89 : vector<8x8xi1>, vector<8x8xi32>
    %cst_24 = arith.constant dense<2147483647> : vector<8xi32>
    %91 = vector.multi_reduction <minsi>, %90, %cst_24 [1] : vector<8x8xi32> to vector<8xi32>
    %92 = vector.shape_cast %91 : vector<8xi32> to vector<8x1xi32>
    %93 = vector.broadcast %3 : vector<1x8xi32> to vector<8x8xi32>
    %94 = vector.broadcast %92 : vector<8x1xi32> to vector<8x8xi32>
    %95 = arith.cmpi eq, %93, %94 : vector<8x8xi32>
    %96 = arith.ori %80, %95 : vector<8x8xi1>
    %c0_25 = arith.constant 0 : index
    %c0_26 = arith.constant 0 : index
    %97 = vector.load %arg3[%c0_25, %c0_26] : memref<8x8xi8, #tpu.memory_space<vmem>>, vector<8x8xi8>
    %c0_i8 = arith.constant 0 : i8
    %98 = vector.broadcast %c0_i8 : i8 to vector<8x8xi8>
    %99 = arith.cmpi ne, %97, %98 : vector<8x8xi8>
    %100 = arith.andi %96, %99 : vector<8x8xi1>
    %cst_27 = arith.constant 0.000000e+00 : f32
    %101 = vector.broadcast %cst_27 : f32 to vector<8x8xf32>
    %102 = arith.select %100, %2, %101 : vector<8x8xi1>, vector<8x8xf32>
    %cst_28 = arith.constant dense<0.000000e+00> : vector<8xf32>
    %103 = vector.multi_reduction <add>, %102, %cst_28 [1] : vector<8x8xf32> to vector<8xf32>
    %104 = vector.shape_cast %103 : vector<8xf32> to vector<8x1xf32>
    %cst_29 = arith.constant 0.166666672 : f32
    %105 = vector.broadcast %cst_29 : f32 to vector<8x1xf32>
    %106 = arith.mulf %104, %105 : vector<8x1xf32>
    %c0_30 = arith.constant 0 : index
    %c0_31 = arith.constant 0 : index
    %107 = vector.load %arg4[%c0_30, %c0_31] : memref<8x1xf32, #tpu.memory_space<vmem>>, vector<8x1xf32>
    tpu.vector_store %arg4[%c0_30, %c0_31], %106 {strides = array<i32>} : memref<8x1xf32, #tpu.memory_space<vmem>>, vector<8x1xf32>,
    return
  }
  func.func @transform_0(%arg0: i32) -> (i32, i32) {
    %c0_i32 = arith.constant 0 : i32
    %c0_i32_0 = arith.constant 0 : i32
    return %arg0, %c0_i32 : i32, i32
  }
  func.func @transform_1(%arg0: i32) -> (i32, i32) {
    %c0_i32 = arith.constant 0 : i32
    %c0_i32_0 = arith.constant 0 : i32
    %c0_i32_1 = arith.constant 0 : i32
    return %c0_i32, %c0_i32_0 : i32, i32
  }
  func.func @transform_2(%arg0: i32) -> (i32, i32) {
    %c0_i32 = arith.constant 0 : i32
    %c0_i32_0 = arith.constant 0 : i32
    return %arg0, %c0_i32 : i32, i32
  }
  func.func @transform_3(%arg0: i32) -> (i32, i32) {
    %c0_i32 = arith.constant 0 : i32
    %c0_i32_0 = arith.constant 0 : i32
    return %arg0, %c0_i32 : i32, i32
  }
}

</mosaic_0001>

<llo_original>
// kernel: tpu_custom_call.1
$region0: #{tpu_custom_call.1}
  #allocation0 [shape = 'u32[]', space=smem, size = 0x4, offset = 0x4, fixed_abs, tag = 'smem constant byte address 0x4 - core index']
  #allocation1 [shape = 'u32[144,128]{1,0:T(1,128)}', space=vmem, size = 0x12000, scoped, tag = 'internal scratch']
  %s0 = inlined_call_operand.vmem [shape: f32[8,128], index: 0, kind: input, shape index: {}]
  %s1 = inlined_call_operand.vmem [shape: f32[128,8], index: 1, kind: input, shape index: {}]
  %s2 = inlined_call_operand.vmem [shape: s8[8,8], index: 2, kind: input, shape index: {}]
  %s3 = inlined_call_operand.hbm [shape: f32[1,8], index: 3, kind: output, shape index: {}]
  %s4 = sld [smem:[#allocation0]]
  $region22: #{tpu_custom_call.1} parent=0
    _
  %s6 = ssub.s32 1, %s4
  %s7 = scalar_select 0, %s6, %s4
  $region1: #{tpu_custom_call.1} parent=0
    #allocation2 [shape = 'u8[512]{0}', space=vmem, size = 0x400, scoped, tag = 'output window, operand 0, single buffered']
    #allocation3 [shape = 's32[1]{0}', space=sflag, size = 0x4, scoped, tag = 'scoped memory for tpu_custom_call.1']
    %8 = vsyncpa [#allocation3], 0
    // Predicated region
    $region2: #{tpu_custom_call.1} parent=1 // pred_check
      _
    $region3: #{tpu_custom_call.1} parent=1 // pred_check_branch
      %10 = sbr.rel (0) target = $region5
    $region4: #{tpu_custom_call.1} parent=1 // pred_region
      _
    $region5: #{tpu_custom_call.1} parent=1 // pred_fallthru
      _
    // Predicated region
    $region6: #{tpu_custom_call.1} parent=1 // pred_check
      _
    $region7: #{tpu_custom_call.1} parent=1 // pred_check_branch
      %12 = sbr.rel (0) target = $region9
    $region8: #{tpu_custom_call.1} parent=1 // pred_region
      _
    $region9: #{tpu_custom_call.1} parent=1 // pred_fallthru
      _
    // Predicated region
    $region10: #{tpu_custom_call.1} parent=1 // pred_check
      _
    $region11: #{tpu_custom_call.1} parent=1 // pred_check_branch
      %14 = sbr.rel (0) target = $region13
    $region12: #{tpu_custom_call.1} parent=1 // pred_region
      _
    $region13: #{tpu_custom_call.1} parent=1 // pred_fallthru
      _
    %v17 = vld [vmem:[%s0] sm:$0xff]
    %v18 = vld [vmem:[%s1] sm:$0xff]
    %v19 = vld [vmem:[%s1 + $0x8] sm:$0xff]
    %v20 = vld [vmem:[%s1 + $0x10] sm:$0xff]
    %v21 = vld [vmem:[%s1 + $0x18] sm:$0xff]
    %v22 = vld [vmem:[%s1 + $0x20] sm:$0xff]
    %v23 = vld [vmem:[%s1 + $0x28] sm:$0xff]
    %v24 = vld [vmem:[%s1 + $0x30] sm:$0xff]
    %v25 = vld [vmem:[%s1 + $0x38] sm:$0xff]
    %v26 = vld [vmem:[%s1 + $0x40] sm:$0xff]
    %v27 = vld [vmem:[%s1 + $0x48] sm:$0xff]
    %v28 = vld [vmem:[%s1 + $0x50] sm:$0xff]
    %v29 = vld [vmem:[%s1 + $0x58] sm:$0xff]
    %v30 = vld [vmem:[%s1 + $0x60] sm:$0xff]
    %v31 = vld [vmem:[%s1 + $0x68] sm:$0xff]
    %v32 = vld [vmem:[%s1 + $0x70] sm:$0xff]
    %v33 = vld [vmem:[%s1 + $0x78] sm:$0xff]
    %34 = vmatprep.subr.mxu0 0.0
    %35 = vmatpush1.msra.mxu0 %v18
    %36 = vmatprep.subr.mxu0 0.0
    %37 = vmatpush1.msra.mxu0 %v19
    %38 = vmatprep.subr.mxu0 0.0
    %39 = vmatpush1.msra.mxu0 %v20
    %40 = vmatprep.subr.mxu0 0.0
    %41 = vmatpush1.msra.mxu0 %v21
    %42 = vmatprep.subr.mxu0 0.0
    %43 = vmatpush1.msra.mxu0 %v22
    %44 = vmatprep.subr.mxu0 0.0
    %45 = vmatpush1.msra.mxu0 %v23
    %46 = vmatprep.subr.mxu0 0.0
    %47 = vmatpush1.msra.mxu0 %v24
    %48 = vmatprep.subr.mxu0 0.0
    %49 = vmatpush1.msra.mxu0 %v25
    %50 = vmatprep.subr.mxu0 0.0
    %51 = vmatpush1.msra.mxu0 %v26
    %52 = vmatprep.subr.mxu0 0.0
    %53 = vmatpush1.msra.mxu0 %v27
    %54 = vmatprep.subr.mxu0 0.0
    %55 = vmatpush1.msra.mxu0 %v28
    %56 = vmatprep.subr.mxu0 0.0
    %57 = vmatpush1.msra.mxu0 %v29
    %58 = vmatprep.subr.mxu0 0.0
    %59 = vmatpush1.msra.mxu0 %v30
    %60 = vmatprep.subr.mxu0 0.0
    %61 = vmatpush1.msra.mxu0 %v31
    %62 = vmatprep.subr.mxu0 0.0
    %63 = vmatpush1.msra.mxu0 %v32
    %64 = vmatprep.subr.mxu0 0.0
    %65 = vmatpush1.msra.mxu0 %v33
    %66 = vmatprep.subr.mxu0 0.0
    %67 = vmatpush1.msra.mxu0 0.0
    %68 = vmatprep.subr.mxu0 0.0
    %69 = vmatpush1.msra.mxu0 0.0
    %70 = vmatprep.subr.mxu0 0.0
    %71 = vmatpush1.msra.mxu0 0.0
    %72 = vmatprep.subr.mxu0 0.0
    %73 = vmatpush1.msra.mxu0 0.0
    %74 = vmatprep.subr.mxu0 0.0
    %75 = vmatpush1.msra.mxu0 0.0
    %76 = vmatprep.subr.mxu0 0.0
    %77 = vmatpush1.msra.mxu0 0.0
    %78 = vmatprep.subr.mxu0 0.0
    %79 = vmatpush1.msra.mxu0 0.0
    %80 = vmatprep.subr.mxu0 0.0
    %81 = vmatpush1.msra.mxu0 0.0
    %82 = vmatprep.subr.mxu0 0.0
    %83 = vmatpush1.msra.mxu0 0.0
    %84 = vmatprep.subr.mxu0 0.0
    %85 = vmatpush1.msra.mxu0 0.0
    %86 = vmatprep.subr.mxu0 0.0
    %87 = vmatpush1.msra.mxu0 0.0
    %88 = vmatprep.subr.mxu0 0.0
    %89 = vmatpush1.msra.mxu0 0.0
    %90 = vmatprep.subr.mxu0 0.0
    %91 = vmatpush1.msra.mxu0 0.0
    %92 = vmatprep.subr.mxu0 0.0
    %93 = vmatpush1.msra.mxu0 0.0
    %94 = vmatprep.subr.mxu0 0.0
    %95 = vmatpush1.msra.mxu0 0.0
    %96 = vmatprep.subr.mxu0 0.0
    %97 = vmatpush1.msra.mxu0 0.0
    %98 = vmatprep.mubr.f32.mxu0 0.0
    %99 = vmatmul.mubr.f32.gmra.mrb[0].mxu0 %v17
    %v100 = vpop.f32.mrb[0].mxu0
    %v101 = vadd.f32 0.0, %v100
    %v102 = vpop.f32.mrb[0].mxu0
    %103 = vdwg.mxu0
    %v104 = vlaneseq
    %v105 = vand.u32 %v104, 127
    %vm106 = vcmask 64512
    %v107 = vsel %vm106, %v101, -inf
    %108 = vmax.xlane.f32.xlu0 %v107
    %v109 = vpop.xlane.xlu0 %108
    %vm110 = vcmp.eq.f32.partialorder %v101, %v109
    %v111 = vsel %vm110, %v105, 8
    %v112 = vsel %vm106, %v111, 2147483647
    %v113 = vand.u32 %v112, 65535
    %v114 = vshra.s32 %v112, 16
    %v115 = vcvt.s32.f32 %v113
    %v116 = vcvt.s32.f32 %v114
    %117 = vmin.xlane.f32.xlu0 %v116
    %v118 = vpop.xlane.xlu0 %117
    %vm119 = vcmp.eq.f32.partialorder %v116, %v118
    %v120 = vsel %vm119, %v115, inf
    %121 = vmin.xlane.f32.xlu0 %v120
    %v122 = vpop.xlane.xlu0 %121
    %v123 = vcvt.f32.s32 %v122
    %v124 = vcvt.f32.s32 %v118
    %v125 = vshll.u32 %v124, 16
    %v126 = vadd.s32 %v125, %v123
    %vm127 = vcmp.eq.s32.totalorder %v105, %v126
    %v128 = vsel %vm127, -inf, %v101
    %v129 = vsel %vm106, %v128, -inf
    %130 = vmax.xlane.f32.xlu0 %v129
    %v131 = vpop.xlane.xlu0 %130
    %vm132 = vcmp.eq.f32.partialorder %v128, %v131
    %v133 = vsel %vm132, %v105, 8
    %v134 = vsel %vm106, %v133, 2147483647
    %v135 = vand.u32 %v134, 65535
    %v136 = vshra.s32 %v134, 16
    %v137 = vcvt.s32.f32 %v135
    %v138 = vcvt.s32.f32 %v136
    %139 = vmin.xlane.f32.xlu0 %v138
    %v140 = vpop.xlane.xlu0 %139
    %vm141 = vcmp.eq.f32.partialorder %v138, %v140
    %v142 = vsel %vm141, %v137, inf
    %143 = vmin.xlane.f32.xlu0 %v142
    %v144 = vpop.xlane.xlu0 %143
    %v145 = vcvt.f32.s32 %v144
    %v146 = vcvt.f32.s32 %v140
    %v147 = vshll.u32 %v146, 16
    %v148 = vadd.s32 %v147, %v145
    %vm149 = vcmp.eq.s32.totalorder %v105, %v148
    %vm150 = vmor %vm127, %vm149
    %v151 = vsel %vm149, -inf, %v128
    %v152 = vsel %vm106, %v151, -inf
    %153 = vmax.xlane.f32.xlu0 %v152
    %v154 = vpop.xlane.xlu0 %153
    %vm155 = vcmp.eq.f32.partialorder %v151, %v154
    %v156 = vsel %vm155, %v105, 8
    %v157 = vsel %vm106, %v156, 2147483647
    %v158 = vand.u32 %v157, 65535
    %v159 = vshra.s32 %v157, 16
    %v160 = vcvt.s32.f32 %v158
    %v161 = vcvt.s32.f32 %v159
    %162 = vmin.xlane.f32.xlu0 %v161
    %v163 = vpop.xlane.xlu0 %162
    %vm164 = vcmp.eq.f32.partialorder %v161, %v163
    %v165 = vsel %vm164, %v160, inf
    %166 = vmin.xlane.f32.xlu0 %v165
    %v167 = vpop.xlane.xlu0 %166
    %v168 = vcvt.f32.s32 %v167
    %v169 = vcvt.f32.s32 %v163
    %v170 = vshll.u32 %v169, 16
    %v171 = vadd.s32 %v170, %v168
    %vm172 = vcmp.eq.s32.totalorder %v105, %v171
    %vm173 = vmor %vm150, %vm172
    %v174 = vsel %vm172, -inf, %v151
    %v175 = vsel %vm106, %v174, -inf
    %176 = vmax.xlane.f32.xlu0 %v175
    %v177 = vpop.xlane.xlu0 %176
    %vm178 = vcmp.eq.f32.partialorder %v174, %v177
    %v179 = vsel %vm178, %v105, 8
    %v180 = vsel %vm106, %v179, 2147483647
    %v181 = vand.u32 %v180, 65535
    %v182 = vshra.s32 %v180, 16
    %v183 = vcvt.s32.f32 %v181
    %v184 = vcvt.s32.f32 %v182
    %185 = vmin.xlane.f32.xlu0 %v184
    %v186 = vpop.xlane.xlu0 %185
    %vm187 = vcmp.eq.f32.partialorder %v184, %v186
    %v188 = vsel %vm187, %v183, inf
    %189 = vmin.xlane.f32.xlu0 %v188
    %v190 = vpop.xlane.xlu0 %189
    %v191 = vcvt.f32.s32 %v190
    %v192 = vcvt.f32.s32 %v186
    %v193 = vshll.u32 %v192, 16
    %v194 = vadd.s32 %v193, %v191
    %vm195 = vcmp.eq.s32.totalorder %v105, %v194
    %vm196 = vmor %vm173, %vm195
    %v197 = vsel %vm195, -inf, %v174
    %v198 = vsel %vm106, %v197, -inf
    %199 = vmax.xlane.f32.xlu0 %v198
    %v200 = vpop.xlane.xlu0 %199
    %vm201 = vcmp.eq.f32.partialorder %v197, %v200
    %v202 = vsel %vm201, %v105, 8
    %v203 = vsel %vm106, %v202, 2147483647
    %v204 = vand.u32 %v203, 65535
    %v205 = vshra.s32 %v203, 16
    %v206 = vcvt.s32.f32 %v204
    %v207 = vcvt.s32.f32 %v205
    %208 = vmin.xlane.f32.xlu0 %v207
    %v209 = vpop.xlane.xlu0 %208
    %vm210 = vcmp.eq.f32.partialorder %v207, %v209
    %v211 = vsel %vm210, %v206, inf
    %212 = vmin.xlane.f32.xlu0 %v211
    %v213 = vpop.xlane.xlu0 %212
    %v214 = vcvt.f32.s32 %v213
    %v215 = vcvt.f32.s32 %v209
    %v216 = vshll.u32 %v215, 16
    %v217 = vadd.s32 %v216, %v214
    %vm218 = vcmp.eq.s32.totalorder %v105, %v217
    %vm219 = vmor %vm196, %vm218
    %v220 = vsel %vm218, -inf, %v197
    %v221 = vsel %vm106, %v220, -inf
    %222 = vmax.xlane.f32.xlu0 %v221
    %v223 = vpop.xlane.xlu0 %222
    %vm224 = vcmp.eq.f32.partialorder %v220, %v223
    %v225 = vsel %vm224, %v105, 8
    %v226 = vsel %vm106, %v225, 2147483647
    %v227 = vand.u32 %v226, 65535
    %v228 = vshra.s32 %v226, 16
    %v229 = vcvt.s32.f32 %v227
    %v230 = vcvt.s32.f32 %v228
    %231 = vmin.xlane.f32.xlu0 %v230
    %v232 = vpop.xlane.xlu0 %231
    %vm233 = vcmp.eq.f32.partialorder %v230, %v232
    %v234 = vsel %vm233, %v229, inf
    %235 = vmin.xlane.f32.xlu0 %v234
    %v236 = vpop.xlane.xlu0 %235
    %v237 = vcvt.f32.s32 %v236
    %v238 = vcvt.f32.s32 %v232
    %v239 = vshll.u32 %v238, 16
    %v240 = vadd.s32 %v239, %v237
    %vm241 = vcmp.eq.s32.totalorder %v105, %v240
    %vm242 = vmor %vm219, %vm241
    %v243 = vld [vmem:[%s2] sm:$0x3]
    %vm244 = vnez %v243
    %v245 = vsel %vm244, 16843009, 0
    %v246 = vunpack.c.0.s8 %v245
    %vm247 = vcmp.ne.s32.totalorder %v246, 0
    %vm248 = vmand %vm242, %vm247
    %v249 = vsel %vm248, %v101, 0.0
    %v250 = vsel %vm106, %v249, 0.0
    %251 = vadd.xlane.f32.xlu0 %v250
    %v252 = vpop.xlane.xlu0 %251
    %v253 = vmul.f32 %v252, 0.16666667
    %254 = vxpose.xlu0.b32.start [1/16] %v253, 128
    %255 = vxpose.xlu0.b32.cont [2/16] 0.0, 128
    %256 = vxpose.xlu0.b32.cont [3/16] 0.0, 128
    %257 = vxpose.xlu0.b32.cont [4/16] 0.0, 128
    %258 = vxpose.xlu0.b32.cont [5/16] 0.0, 128
    %259 = vxpose.xlu0.b32.cont [6/16] 0.0, 128
    %260 = vxpose.xlu0.b32.cont [7/16] 0.0, 128
    %261 = vxpose.xlu0.b32.cont [8/16] 0.0, 128
    %262 = vxpose.xlu0.b32.cont [9/16] 0.0, 128
    %263 = vxpose.xlu0.b32.cont [10/16] 0.0, 128
    %264 = vxpose.xlu0.b32.cont [11/16] 0.0, 128
    %265 = vxpose.xlu0.b32.cont [12/16] 0.0, 128
    %266 = vxpose.xlu0.b32.cont [13/16] 0.0, 128
    %267 = vxpose.xlu0.b32.cont [14/16] 0.0, 128
    %268 = vxpose.xlu0.b32.cont [15/16] 0.0, 128
    %269 = vxpose.xlu0.b32.end [16/16] 0.0, 128
    %v270 = vpop.trf.xlu0
    %v271 = vpop.trf.xlu0
    %v272 = vpop.trf.xlu0
    %v273 = vpop.trf.xlu0
    %v274 = vpop.trf.xlu0
    %v275 = vpop.trf.xlu0
    %v276 = vpop.trf.xlu0
    %v277 = vpop.trf.xlu0
    %v278 = vpop.trf.xlu0
    %v279 = vpop.trf.xlu0
    %v280 = vpop.trf.xlu0
    %v281 = vpop.trf.xlu0
    %v282 = vpop.trf.xlu0
    %v283 = vpop.trf.xlu0
    %v284 = vpop.trf.xlu0
    %v285 = vpop.trf.xlu0
    %vm286 = vcmask 57344
    %287 = vst.msk [vmem:[#allocation2] sm:$0x1] %vm286, %v270
    // Predicated region
    $region14: #{tpu_custom_call.1} parent=1 // pred_check
      _
    $region15: #{tpu_custom_call.1} parent=1 // pred_check_branch
      %289 = sbr.rel (0) target = $region17
    $region16: #{tpu_custom_call.1} parent=1 // pred_region
      %s291 = ssub.s32 16, 16
      %292 = vsyncadd [#allocation3], %s291
      %s294 = sshll.u32 [#allocation2], 4
      %s295 = int_to_ptr.vmem [resolvable:$true] %s294
      %297 = dma.vmem_to_hbm [thread:$0]  %s295, 16, %s3, [#allocation3]
    $region17: #{tpu_custom_call.1} parent=1 // pred_fallthru
      _
    // Predicated region
    $region18: #{tpu_custom_call.1} parent=1 // pred_check
      _
    $region19: #{tpu_custom_call.1} parent=1 // pred_check_branch
      %299 = sbr.rel (0) target = $region21
    $region20: #{tpu_custom_call.1} parent=1 // pred_region
      %300 = dma.done [#allocation3], 16
    $region21: #{tpu_custom_call.1} parent=1 // pred_fallthru
      _
    %301 = vsyncpa [#allocation3], 1

// kernel: tpu_custom_call.1
$region0: #{tpu_custom_call.1}
  #allocation0 [shape = 'u32[]', space=smem, size = 0x4, offset = 0x4, fixed_abs, tag = 'smem constant byte address 0x4 - core index']
  #allocation1 [shape = 'u32[144,128]{1,0:T(1,128)}', space=vmem, size = 0x12000, scoped, tag = 'internal scratch']
  %s0 = inlined_call_operand.vmem [shape: f32[8,128], index: 0, kind: input, shape index: {}]
  %s1 = inlined_call_operand.vmem [shape: f32[128,8], index: 1, kind: input, shape index: {}]
  %s2 = inlined_call_operand.vmem [shape: s8[8,8], index: 2, kind: input, shape index: {}]
  %s3 = inlined_call_operand.vmem [shape: f32[8,1], index: 3, kind: output, shape index: {}]
  %s4 = sld [smem:[#allocation0]]
  $region22: #{tpu_custom_call.1} parent=0
    _
  %s6 = ssub.s32 1, %s4
  %s7 = scalar_select 0, %s6, %s4
  // Predicated region
  $region2: #{tpu_custom_call.1} parent=0 // pred_check
    _
  $region3: #{tpu_custom_call.1} parent=0 // pred_check_branch
    %9 = sbr.rel (0) target = $region5
  $region4: #{tpu_custom_call.1} parent=0 // pred_region
    _
  $region5: #{tpu_custom_call.1} parent=0 // pred_fallthru
    _
  // Predicated region
  $region6: #{tpu_custom_call.1} parent=0 // pred_check
    _
  $region7: #{tpu_custom_call.1} parent=0 // pred_check_branch
    %11 = sbr.rel (0) target = $region9
  $region8: #{tpu_custom_call.1} parent=0 // pred_region
    _
  $region9: #{tpu_custom_call.1} parent=0 // pred_fallthru
    _
  // Predicated region
  $region10: #{tpu_custom_call.1} parent=0 // pred_check
    _
  $region11: #{tpu_custom_call.1} parent=0 // pred_check_branch
    %13 = sbr.rel (0) target = $region13
  $region12: #{tpu_custom_call.1} parent=0 // pred_region
    _
  $region13: #{tpu_custom_call.1} parent=0 // pred_fallthru
    _
  %v16 = vld [vmem:[%s0] sm:$0xff]
  %v17 = vld [vmem:[%s1] sm:$0xff]
  %v18 = vld [vmem:[%s1 + $0x8] sm:$0xff]
  %v19 = vld [vmem:[%s1 + $0x10] sm:$0xff]
  %v20 = vld [vmem:[%s1 + $0x18] sm:$0xff]
  %v21 = vld [vmem:[%s1 + $0x20] sm:$0xff]
  %v22 = vld [vmem:[%s1 + $0x28] sm:$0xff]
  %v23 = vld [vmem:[%s1 + $0x30] sm:$0xff]
  %v24 = vld [vmem:[%s1 + $0x38] sm:$0xff]
  %v25 = vld [vmem:[%s1 + $0x40] sm:$0xff]
  %v26 = vld [vmem:[%s1 + $0x48] sm:$0xff]
  %v27 = vld [vmem:[%s1 + $0x50] sm:$0xff]
  %v28 = vld [vmem:[%s1 + $0x58] sm:$0xff]
  %v29 = vld [vmem:[%s1 + $0x60] sm:$0xff]
  %v30 = vld [vmem:[%s1 + $0x68] sm:$0xff]
  %v31 = vld [vmem:[%s1 + $0x70] sm:$0xff]
  %v32 = vld [vmem:[%s1 + $0x78] sm:$0xff]
  %33 = vmatprep.subr.mxu0 0.0
  %34 = vmatpush1.msra.mxu0 %v17
  %35 = vmatprep.subr.mxu0 0.0
  %36 = vmatpush1.msra.mxu0 %v18
  %37 = vmatprep.subr.mxu0 0.0
  %38 = vmatpush1.msra.mxu0 %v19
  %39 = vmatprep.subr.mxu0 0.0
  %40 = vmatpush1.msra.mxu0 %v20
  %41 = vmatprep.subr.mxu0 0.0
  %42 = vmatpush1.msra.mxu0 %v21
  %43 = vmatprep.subr.mxu0 0.0
  %44 = vmatpush1.msra.mxu0 %v22
  %45 = vmatprep.subr.mxu0 0.0
  %46 = vmatpush1.msra.mxu0 %v23
  %47 = vmatprep.subr.mxu0 0.0
  %48 = vmatpush1.msra.mxu0 %v24
  %49 = vmatprep.subr.mxu0 0.0
  %50 = vmatpush1.msra.mxu0 %v25
  %51 = vmatprep.subr.mxu0 0.0
  %52 = vmatpush1.msra.mxu0 %v26
  %53 = vmatprep.subr.mxu0 0.0
  %54 = vmatpush1.msra.mxu0 %v27
  %55 = vmatprep.subr.mxu0 0.0
  %56 = vmatpush1.msra.mxu0 %v28
  %57 = vmatprep.subr.mxu0 0.0
  %58 = vmatpush1.msra.mxu0 %v29
  %59 = vmatprep.subr.mxu0 0.0
  %60 = vmatpush1.msra.mxu0 %v30
  %61 = vmatprep.subr.mxu0 0.0
  %62 = vmatpush1.msra.mxu0 %v31
  %63 = vmatprep.subr.mxu0 0.0
  %64 = vmatpush1.msra.mxu0 %v32
  %65 = vmatprep.subr.mxu0 0.0
  %66 = vmatpush1.msra.mxu0 0.0
  %67 = vmatprep.subr.mxu0 0.0
  %68 = vmatpush1.msra.mxu0 0.0
  %69 = vmatprep.subr.mxu0 0.0
  %70 = vmatpush1.msra.mxu0 0.0
  %71 = vmatprep.subr.mxu0 0.0
  %72 = vmatpush1.msra.mxu0 0.0
  %73 = vmatprep.subr.mxu0 0.0
  %74 = vmatpush1.msra.mxu0 0.0
  %75 = vmatprep.subr.mxu0 0.0
  %76 = vmatpush1.msra.mxu0 0.0
  %77 = vmatprep.subr.mxu0 0.0
  %78 = vmatpush1.msra.mxu0 0.0
  %79 = vmatprep.subr.mxu0 0.0
  %80 = vmatpush1.msra.mxu0 0.0
  %81 = vmatprep.subr.mxu0 0.0
  %82 = vmatpush1.msra.mxu0 0.0
  %83 = vmatprep.subr.mxu0 0.0
  %84 = vmatpush1.msra.mxu0 0.0
  %85 = vmatprep.subr.mxu0 0.0
  %86 = vmatpush1.msra.mxu0 0.0
  %87 = vmatprep.subr.mxu0 0.0
  %88 = vmatpush1.msra.mxu0 0.0
  %89 = vmatprep.subr.mxu0 0.0
  %90 = vmatpush1.msra.mxu0 0.0
  %91 = vmatprep.subr.mxu0 0.0
  %92 = vmatpush1.msra.mxu0 0.0
  %93 = vmatprep.subr.mxu0 0.0
  %94 = vmatpush1.msra.mxu0 0.0
  %95 = vmatprep.subr.mxu0 0.0
  %96 = vmatpush1.msra.mxu0 0.0
  %97 = vmatprep.mubr.f32.mxu0 0.0
  %98 = vmatmul.mubr.f32.gmra.mrb[0].mxu0 %v16
  %v99 = vpop.f32.mrb[0].mxu0
  %v100 = vadd.f32 0.0, %v99
  %v101 = vpop.f32.mrb[0].mxu0
  %102 = vdwg.mxu0
  %v103 = vlaneseq
  %v104 = vand.u32 %v103, 127
  %vm105 = vcmask 64512
  %v106 = vsel %vm105, %v100, -inf
  %107 = vmax.xlane.f32.xlu0 %v106
  %v108 = vpop.xlane.xlu0 %107
  %vm109 = vcmp.eq.f32.partialorder %v100, %v108
  %v110 = vsel %vm109, %v104, 8
  %v111 = vsel %vm105, %v110, 2147483647
  %v112 = vand.u32 %v111, 65535
  %v113 = vshra.s32 %v111, 16
  %v114 = vcvt.s32.f32 %v112
  %v115 = vcvt.s32.f32 %v113
  %116 = vmin.xlane.f32.xlu0 %v115
  %v117 = vpop.xlane.xlu0 %116
  %vm118 = vcmp.eq.f32.partialorder %v115, %v117
  %v119 = vsel %vm118, %v114, inf
  %120 = vmin.xlane.f32.xlu0 %v119
  %v121 = vpop.xlane.xlu0 %120
  %v122 = vcvt.f32.s32 %v121
  %v123 = vcvt.f32.s32 %v117
  %v124 = vshll.u32 %v123, 16
  %v125 = vadd.s32 %v124, %v122
  %vm126 = vcmp.eq.s32.totalorder %v104, %v125
  %v127 = vsel %vm126, -inf, %v100
  %v128 = vsel %vm105, %v127, -inf
  %129 = vmax.xlane.f32.xlu0 %v128
  %v130 = vpop.xlane.xlu0 %129
  %vm131 = vcmp.eq.f32.partialorder %v127, %v130
  %v132 = vsel %vm131, %v104, 8
  %v133 = vsel %vm105, %v132, 2147483647
  %v134 = vand.u32 %v133, 65535
  %v135 = vshra.s32 %v133, 16
  %v136 = vcvt.s32.f32 %v134
  %v137 = vcvt.s32.f32 %v135
  %138 = vmin.xlane.f32.xlu0 %v137
  %v139 = vpop.xlane.xlu0 %138
  %vm140 = vcmp.eq.f32.partialorder %v137, %v139
  %v141 = vsel %vm140, %v136, inf
  %142 = vmin.xlane.f32.xlu0 %v141
  %v143 = vpop.xlane.xlu0 %142
  %v144 = vcvt.f32.s32 %v143
  %v145 = vcvt.f32.s32 %v139
  %v146 = vshll.u32 %v145, 16
  %v147 = vadd.s32 %v146, %v144
  %vm148 = vcmp.eq.s32.totalorder %v104, %v147
  %vm149 = vmor %vm126, %vm148
  %v150 = vsel %vm148, -inf, %v127
  %v151 = vsel %vm105, %v150, -inf
  %152 = vmax.xlane.f32.xlu0 %v151
  %v153 = vpop.xlane.xlu0 %152
  %vm154 = vcmp.eq.f32.partialorder %v150, %v153
  %v155 = vsel %vm154, %v104, 8
  %v156 = vsel %vm105, %v155, 2147483647
  %v157 = vand.u32 %v156, 65535
  %v158 = vshra.s32 %v156, 16
  %v159 = vcvt.s32.f32 %v157
  %v160 = vcvt.s32.f32 %v158
  %161 = vmin.xlane.f32.xlu0 %v160
  %v162 = vpop.xlane.xlu0 %161
  %vm163 = vcmp.eq.f32.partialorder %v160, %v162
  %v164 = vsel %vm163, %v159, inf
  %165 = vmin.xlane.f32.xlu0 %v164
  %v166 = vpop.xlane.xlu0 %165
  %v167 = vcvt.f32.s32 %v166
  %v168 = vcvt.f32.s32 %v162
  %v169 = vshll.u32 %v168, 16
  %v170 = vadd.s32 %v169, %v167
  %vm171 = vcmp.eq.s32.totalorder %v104, %v170
  %vm172 = vmor %vm149, %vm171
  %v173 = vsel %vm171, -inf, %v150
  %v174 = vsel %vm105, %v173, -inf
  %175 = vmax.xlane.f32.xlu0 %v174
  %v176 = vpop.xlane.xlu0 %175
  %vm177 = vcmp.eq.f32.partialorder %v173, %v176
  %v178 = vsel %vm177, %v104, 8
  %v179 = vsel %vm105, %v178, 2147483647
  %v180 = vand.u32 %v179, 65535
  %v181 = vshra.s32 %v179, 16
  %v182 = vcvt.s32.f32 %v180
  %v183 = vcvt.s32.f32 %v181
  %184 = vmin.xlane.f32.xlu0 %v183
  %v185 = vpop.xlane.xlu0 %184
  %vm186 = vcmp.eq.f32.partialorder %v183, %v185
  %v187 = vsel %vm186, %v182, inf
  %188 = vmin.xlane.f32.xlu0 %v187
  %v189 = vpop.xlane.xlu0 %188
  %v190 = vcvt.f32.s32 %v189
  %v191 = vcvt.f32.s32 %v185
  %v192 = vshll.u32 %v191, 16
  %v193 = vadd.s32 %v192, %v190
  %vm194 = vcmp.eq.s32.totalorder %v104, %v193
  %vm195 = vmor %vm172, %vm194
  %v196 = vsel %vm194, -inf, %v173
  %v197 = vsel %vm105, %v196, -inf
  %198 = vmax.xlane.f32.xlu0 %v197
  %v199 = vpop.xlane.xlu0 %198
  %vm200 = vcmp.eq.f32.partialorder %v196, %v199
  %v201 = vsel %vm200, %v104, 8
  %v202 = vsel %vm105, %v201, 2147483647
  %v203 = vand.u32 %v202, 65535
  %v204 = vshra.s32 %v202, 16
  %v205 = vcvt.s32.f32 %v203
  %v206 = vcvt.s32.f32 %v204
  %207 = vmin.xlane.f32.xlu0 %v206
  %v208 = vpop.xlane.xlu0 %207
  %vm209 = vcmp.eq.f32.partialorder %v206, %v208
  %v210 = vsel %vm209, %v205, inf
  %211 = vmin.xlane.f32.xlu0 %v210
  %v212 = vpop.xlane.xlu0 %211
  %v213 = vcvt.f32.s32 %v212
  %v214 = vcvt.f32.s32 %v208
  %v215 = vshll.u32 %v214, 16
  %v216 = vadd.s32 %v215, %v213
  %vm217 = vcmp.eq.s32.totalorder %v104, %v216
  %vm218 = vmor %vm195, %vm217
  %v219 = vsel %vm217, -inf, %v196
  %v220 = vsel %vm105, %v219, -inf
  %221 = vmax.xlane.f32.xlu0 %v220
  %v222 = vpop.xlane.xlu0 %221
  %vm223 = vcmp.eq.f32.partialorder %v219, %v222
  %v224 = vsel %vm223, %v104, 8
  %v225 = vsel %vm105, %v224, 2147483647
  %v226 = vand.u32 %v225, 65535
  %v227 = vshra.s32 %v225, 16
  %v228 = vcvt.s32.f32 %v226
  %v229 = vcvt.s32.f32 %v227
  %230 = vmin.xlane.f32.xlu0 %v229
  %v231 = vpop.xlane.xlu0 %230
  %vm232 = vcmp.eq.f32.partialorder %v229, %v231
  %v233 = vsel %vm232, %v228, inf
  %234 = vmin.xlane.f32.xlu0 %v233
  %v235 = vpop.xlane.xlu0 %234
  %v236 = vcvt.f32.s32 %v235
  %v237 = vcvt.f32.s32 %v231
  %v238 = vshll.u32 %v237, 16
  %v239 = vadd.s32 %v238, %v236
  %vm240 = vcmp.eq.s32.totalorder %v104, %v239
  %vm241 = vmor %vm218, %vm240
  %v242 = vld [vmem:[%s2] sm:$0x3]
  %vm243 = vnez %v242
  %v244 = vsel %vm243, 16843009, 0
  %v245 = vunpack.c.0.s8 %v244
  %vm246 = vcmp.ne.s32.totalorder %v245, 0
  %vm247 = vmand %vm241, %vm246
  %v248 = vsel %vm247, %v100, 0.0
  %v249 = vsel %vm105, %v248, 0.0
  %250 = vadd.xlane.f32.xlu0 %v249
  %v251 = vpop.xlane.xlu0 %250
  %v252 = vmul.f32 %v251, 0.16666667
  %vm253 = vcmask 7168
  %254 = vst.msk [vmem:[%s3] sm:$0xff] %vm253, %v252
  // Predicated region
  $region14: #{tpu_custom_call.1} parent=0 // pred_check
    _
  $region15: #{tpu_custom_call.1} parent=0 // pred_check_branch
    %256 = sbr.rel (0) target = $region17
  $region16: #{tpu_custom_call.1} parent=0 // pred_region
    _
  $region17: #{tpu_custom_call.1} parent=0 // pred_fallthru
    _
  // Predicated region
  $region18: #{tpu_custom_call.1} parent=0 // pred_check
    _
  $region19: #{tpu_custom_call.1} parent=0 // pred_check_branch
    %258 = sbr.rel (0) target = $region21
  $region20: #{tpu_custom_call.1} parent=0 // pred_region
    _
  $region21: #{tpu_custom_call.1} parent=0 // pred_fallthru
    _

</llo_original>
